<compile_context>
chip_gen: v7x
topology: tpu7x:2x2x1
jax: 0.10.0
libtpu: 0.0.40
codegen_flags: <defaults>
</compile_context>

<pallas_src>
import jax
import jax.numpy as jnp
from jax.experimental import pallas as pl
from jax.experimental.pallas import tpu as pltpu


def _lambd_ref(x):
    # The concrete deterministic "lambd": elementwise relu(x) * 2 + 1.
    return jnp.maximum(x, 0.0) * 2.0 + 1.0


def _lambda_kernel(x_ref, o_ref):
    x = x_ref[...]
    o_ref[...] = jnp.maximum(x, 0.0) * 2.0 + 1.0


def lambda_module_forward(x):
    """Pallas equivalent of LambdaModule(lambd=relu(x)*2+1).forward(x).

    x: [B, C, H, W] float32 (NCHW). Returns same shape/dtype.
    """
    orig_shape = x.shape
    n = x.size

    # Pick the widest lane-dense last dim (multiple of 128) that divides n
    # exactly, preferring layouts that also give >= 8 rows (full vregs).
    lane = None
    for cand in (8192, 4096, 2048, 1024, 512, 256, 128):
        if n % cand == 0 and n // cand >= 8:
            lane = cand
            break
    if lane is None:
        for cand in (8192, 4096, 2048, 1024, 512, 256, 128):
            if n % cand == 0:
                lane = cand
                break
    if lane is None:
        # No factor of 128: for a memory-bound elementwise op, pad + slice
        # would triple HBM traffic, so let XLA fuse it directly instead.
        return _lambd_ref(x)

    rows = n // lane
    slab = x.reshape(rows, lane)          # no-copy reshape, no pad

    # ~4 MiB blocks: large enough to hide DMA/step overhead on v5e/v6e/v7x,
    # small enough that double-buffered in+out (~16 MiB) fits v7x's default
    # 32 MiB scoped VMEM without raising vmem_limit_bytes.
    itemsize = x.dtype.itemsize
    target_block_bytes = 4 * 1024 * 1024
    block_rows = (target_block_bytes // (lane * itemsize)) // 8 * 8
    block_rows = max(block_rows, 8)
    if block_rows >= rows:
        block_rows = rows                 # single full-array block (always legal)
    num_blocks = pl.cdiv(rows, block_rows)  # ragged last block masked by Pallas

    out_slab = pl.pallas_call(
        _lambda_kernel,
        out_shape=jax.ShapeDtypeStruct((rows, lane), x.dtype),
        grid_spec=pltpu.PrefetchScalarGridSpec(
            num_scalar_prefetch=0,
            grid=(num_blocks,),
            in_specs=[pl.BlockSpec((block_rows, lane), lambda i: (i, 0))],
            out_specs=pl.BlockSpec((block_rows, lane), lambda i: (i, 0)),
        ),
        compiler_params=pltpu.CompilerParams(
            dimension_semantics=("parallel",)),
        input_output_aliases={0: 0},
    )(slab)

    return out_slab.reshape(orig_shape)


if __name__ == "__main__":
    key = jax.random.PRNGKey(0)
    x = jax.random.normal(key, (2, 4, 16, 16), dtype=jnp.float32)

    # Reference of the lambda semantics (computed up front).
    ref = jnp.maximum(x, 0.0) * 2.0 + 1.0

    out = lambda_module_forward(x)
    out = jax.block_until_ready(out)

    assert out.shape == x.shape and out.dtype == x.dtype
    assert jnp.allclose(out, ref, atol=1e-6), "mismatch vs reference"

    print("KERNEL_OK")
</pallas_src>

<mosaic_0001>
module attributes {stable_mosaic.version = 11 : i64} {
  func.func @_lambda_kernel(%arg0: i32, %arg1: memref<8x256xf32, #tpu.memory_space<vmem>>, %arg2: memref<8x256xf32, #tpu.memory_space<vmem>>) attributes {dimension_semantics = [#tpu.dimension_semantics<parallel>], iteration_bounds = array<i64: 1>, scalar_prefetch = 0 : i64, scratch_operands = 0 : i64, tpu.core_type = #tpu.core_type<tc>, window_params = [{transform_indices = @transform_0, window_bounds = array<i64: 8, 256>}, {transform_indices = @transform_1, window_bounds = array<i64: 8, 256>}]} {
    %c0 = arith.constant 0 : index
    %c0_0 = arith.constant 0 : index
    %0 = vector.load %arg1[%c0, %c0_0] : memref<8x256xf32, #tpu.memory_space<vmem>>, vector<8x256xf32>
    %cst = arith.constant 0.000000e+00 : f32
    %1 = vector.broadcast %cst : f32 to vector<8x256xf32>
    %2 = arith.maximumf %0, %1 : vector<8x256xf32>
    %cst_1 = arith.constant 2.000000e+00 : f32
    %3 = vector.broadcast %cst_1 : f32 to vector<8x256xf32>
    %4 = arith.mulf %2, %3 : vector<8x256xf32>
    %cst_2 = arith.constant 1.000000e+00 : f32
    %5 = vector.broadcast %cst_2 : f32 to vector<8x256xf32>
    %6 = arith.addf %4, %5 : vector<8x256xf32>
    %c0_3 = arith.constant 0 : index
    %c0_4 = arith.constant 0 : index
    %7 = vector.load %arg2[%c0_3, %c0_4] : memref<8x256xf32, #tpu.memory_space<vmem>>, vector<8x256xf32>
    tpu.vector_store %arg2[%c0_3, %c0_4], %6 {strides = array<i32>} : memref<8x256xf32, #tpu.memory_space<vmem>>, vector<8x256xf32>,
    return
  }
  func.func @transform_0(%arg0: i32) -> (i32, i32) {
    %c0_i32 = arith.constant 0 : i32
    %c0_i32_0 = arith.constant 0 : i32
    return %arg0, %c0_i32 : i32, i32
  }
  func.func @transform_1(%arg0: i32) -> (i32, i32) {
    %c0_i32 = arith.constant 0 : i32
    %c0_i32_0 = arith.constant 0 : i32
    return %arg0, %c0_i32 : i32, i32
  }
}

</mosaic_0001>

<llo_original>
// kernel: tpu_custom_call.1
$region0: #{tpu_custom_call.1}
  #allocation0 [shape = 'u32[]', space=smem, size = 0x4, offset = 0x4, fixed_abs, tag = 'smem constant byte address 0x4 - core index']
  #allocation1 [shape = 'u32[144,128]{1,0:T(1,128)}', space=vmem, size = 0x12000, scoped, tag = 'internal scratch']
  %s0 = inlined_call_operand.hbm [shape: f32[8,256], index: 0, kind: input, shape index: {}, may-alias: {0,1}]
  %s1 = inlined_call_operand.hbm [shape: f32[8,256], index: 1, kind: output, shape index: {}, may-alias: {0,1}]
  %s2 = sld [smem:[#allocation0]]
  $region18: #{tpu_custom_call.1} parent=0
    _
  %s4 = ssub.s32 1, %s2
  %s5 = scalar_select 0, %s4, %s2
  $region1: #{tpu_custom_call.1} parent=0
    #allocation2 [shape = 'u8[8192]{0}', space=vmem, size = 0x2000, scoped, tag = 'input window, operand 0, single buffered']
    #allocation3 [shape = 's32[1]{0}', space=sflag, size = 0x4, scoped, tag = 'scoped memory for tpu_custom_call.1']
    #allocation4 [shape = 's32[1]{0}', space=sflag, size = 0x4, scoped, tag = 'scoped memory for tpu_custom_call.1']
    #allocation5 [shape = 'u8[8192]{0}', space=vmem, size = 0x2000, scoped, tag = 'output window, operand 0, single buffered']
    %6 = vsyncpa [#allocation3], 0
    %7 = vsyncpa [#allocation4], 0
    // Predicated region
    $region2: #{tpu_custom_call.1} parent=1 // pred_check
      _
    $region3: #{tpu_custom_call.1} parent=1 // pred_check_branch
      %9 = sbr.rel (0) target = $region5
    $region4: #{tpu_custom_call.1} parent=1 // pred_region
      %s11 = ssub.s32 256, 256
      %12 = vsyncadd [#allocation3], %s11
      %s14 = sshll.u32 [#allocation2], 4
      %s15 = int_to_ptr.vmem [resolvable:$true] %s14
      %17 = dma.hbm_to_vmem [thread:$0]  %s0, 256, %s15, [#allocation3]
    $region5: #{tpu_custom_call.1} parent=1 // pred_fallthru
      _
    // Predicated region
    $region6: #{tpu_custom_call.1} parent=1 // pred_check
      _
    $region7: #{tpu_custom_call.1} parent=1 // pred_check_branch
      %19 = sbr.rel (0) target = $region9
    $region8: #{tpu_custom_call.1} parent=1 // pred_region
      %20 = dma.done [#allocation3], 256
    $region9: #{tpu_custom_call.1} parent=1 // pred_fallthru
      _
    %v21 = vld [vmem:[#allocation2] sm:$0xff]
    %v22 = vld [vmem:[#allocation2 + $0x8] sm:$0xff]
    %v23 = vmax.f32 %v21, 0.0
    %v24 = vmax.f32 %v22, 0.0
    %v25 = vmul.f32 %v23, 2.0
    %v26 = vmul.f32 %v24, 2.0
    %v27 = vadd.f32 %v25, 1.0
    %v28 = vadd.f32 %v26, 1.0
    %29 = vst [vmem:[#allocation5] sm:$0xff] %v27
    %30 = vst [vmem:[#allocation5 + $0x8] sm:$0xff] %v28
    // Predicated region
    $region10: #{tpu_custom_call.1} parent=1 // pred_check
      _
    $region11: #{tpu_custom_call.1} parent=1 // pred_check_branch
      %32 = sbr.rel (0) target = $region13
    $region12: #{tpu_custom_call.1} parent=1 // pred_region
      %s34 = ssub.s32 256, 256
      %35 = vsyncadd [#allocation4], %s34
      %s37 = sshll.u32 [#allocation5], 4
      %s38 = int_to_ptr.vmem [resolvable:$true] %s37
      %40 = dma.vmem_to_hbm [thread:$0]  %s38, 256, %s1, [#allocation4]
    $region13: #{tpu_custom_call.1} parent=1 // pred_fallthru
      _
    // Predicated region
    $region14: #{tpu_custom_call.1} parent=1 // pred_check
      _
    $region15: #{tpu_custom_call.1} parent=1 // pred_check_branch
      %42 = sbr.rel (0) target = $region17
    $region16: #{tpu_custom_call.1} parent=1 // pred_region
      %43 = dma.done [#allocation4], 256
    $region17: #{tpu_custom_call.1} parent=1 // pred_fallthru
      _
    %44 = vsyncpa [#allocation3], 1
    %45 = vsyncpa [#allocation4], 1

</llo_original>
